<compile_context>
chip_gen: v6e
topology: v6e:2x2x1
jax: 0.10.0
libtpu: 0.0.40
codegen_flags: <defaults>
</compile_context>

<pallas_src>
import jax
import jax.numpy as jnp
from jax import lax
from jax.experimental import pallas as pl
from jax.experimental.pallas import tpu as pltpu


def _aggregator_kernel(x_ref, w_ref, b_ref, o_ref, acc_ref):
    k = pl.program_id(2)

    @pl.when(k == 0)
    def _():
        # Seed the accumulator with the bias tile (1, tn) -> (tm, tn): the
        # bias add is fused into init, keeping the epilogue to ReLU + store.
        acc_ref[...] = jnp.broadcast_to(
            b_ref[...].astype(jnp.float32), acc_ref.shape)

    # x_ref: (tm, tk), w_ref: (tn, tk) — contract on K (dim 1 of both).
    # Pure MXU accumulate in the inner loop.
    acc_ref[...] += lax.dot_general(
        x_ref[...], w_ref[...],
        dimension_numbers=(((1,), (1,)), ((), ())),
        preferred_element_type=jnp.float32,
    )

    @pl.when(k == pl.num_programs(2) - 1)
    def _():
        o_ref[...] = jnp.maximum(acc_ref[...], 0.0).astype(o_ref.dtype)


def _round_up(v, m):
    return ((v + m - 1) // m) * m


def aggregator_forward(x, weight, bias, *, tm=256, tn=256, tk=512):
    """x: (B, D_in), weight: (D_out, D_in) (PyTorch layout), bias: (D_out,)."""
    B, D_in = x.shape
    D_out = weight.shape[0]

    # Clamp tile sizes to the (alignment-rounded) problem dims while keeping
    # the TPU (8, 128) block constraint: sublane multiple of 8, lane of 128.
    tm = min(tm, _round_up(B, 8))
    tn = min(tn, _round_up(D_out, 128))
    tk = min(tk, _round_up(D_in, 128))

    # Pad every dim up to a multiple of its tile so the grid divides evenly
    # and the output lane dim is a dense multiple of 128 (no masked stores).
    Bp = _round_up(B, tm)
    Kp = _round_up(D_in, tk)
    Np = _round_up(D_out, tn)

    xp = x if (Bp == B and Kp == D_in) else jnp.pad(
        x, ((0, Bp - B), (0, Kp - D_in)))
    wp = weight if (Np == D_out and Kp == D_in) else jnp.pad(
        weight, ((0, Np - D_out), (0, Kp - D_in)))
    bp = (bias if Np == D_out else jnp.pad(bias, (0, Np - D_out))).reshape(1, Np)

    grid = (Bp // tm, Np // tn, Kp // tk)

    out = pl.pallas_call(
        _aggregator_kernel,
        out_shape=jax.ShapeDtypeStruct((Bp, Np), x.dtype),
        grid_spec=pltpu.PrefetchScalarGridSpec(
            num_scalar_prefetch=0,
            grid=grid,
            in_specs=[
                pl.BlockSpec((tm, tk), lambda i, j, k: (i, k)),   # x tile
                pl.BlockSpec((tn, tk), lambda i, j, k: (j, k)),   # W tile (D_out, D_in)
                pl.BlockSpec((1, tn), lambda i, j, k: (0, j)),    # bias tile
            ],
            out_specs=pl.BlockSpec((tm, tn), lambda i, j, k: (i, j)),
            scratch_shapes=[pltpu.VMEM((tm, tn), jnp.float32)],
        ),
        compiler_params=pltpu.CompilerParams(
            dimension_semantics=("parallel", "parallel", "arbitrary"),
            vmem_limit_bytes=64 * 1024 * 1024,
        ),
    )(xp, wp, bp)

    if Bp != B or Np != D_out:
        out = out[:B, :D_out]
    return out


def init_aggregator_params(key, input_dim, output_dim):
    # Deterministic init mirroring nn.Linear's U(-1/sqrt(fan_in), 1/sqrt(fan_in)).
    kw, kb = jax.random.split(key)
    bound = 1.0 / jnp.sqrt(jnp.float32(input_dim))
    weight = jax.random.uniform(kw, (output_dim, input_dim),
                                minval=-bound, maxval=bound, dtype=jnp.float32)
    bias = jax.random.uniform(kb, (output_dim,),
                              minval=-bound, maxval=bound, dtype=jnp.float32)
    return weight, bias


if __name__ == "__main__":
    key = jax.random.PRNGKey(0)
    kx, kp, kx2, kp2 = jax.random.split(key, 4)

    # Small demo shape consistent with the module (pure MLP: (B, D_in)).
    B, input_dim, output_dim = 8, 32, 32
    x = jax.random.normal(kx, (B, input_dim), dtype=jnp.float32)
    weight, bias = init_aggregator_params(kp, input_dim, output_dim)

    out = jax.block_until_ready(aggregator_forward(x, weight, bias))
    ref = jnp.maximum(x @ weight.T + bias, 0.0)
    assert out.shape == (B, output_dim)
    assert jnp.allclose(out, ref, atol=1e-5, rtol=1e-5)

    # Second shape exercising the tiled + padded path (non-aligned dims,
    # multiple K blocks so the accumulator/init/epilogue phases all fire).
    B2, d_in2, d_out2 = 100, 200, 300
    x2 = jax.random.normal(kx2, (B2, d_in2), dtype=jnp.float32)
    w2, b2 = init_aggregator_params(kp2, d_in2, d_out2)
    out2 = jax.block_until_ready(aggregator_forward(x2, w2, b2, tk=128))
    ref2 = jnp.maximum(x2 @ w2.T + b2, 0.0)
    assert out2.shape == (B2, d_out2)
    assert jnp.allclose(out2, ref2, atol=1e-4, rtol=1e-4)

    print("KERNEL_OK")
</pallas_src>

<mosaic_0001>
module attributes {stable_mosaic.version = 11 : i64} {
  func.func @_aggregator_kernel(%arg0: i32, %arg1: i32, %arg2: i32, %arg3: memref<8x128xf32, #tpu.memory_space<vmem>>, %arg4: memref<128x128xf32, #tpu.memory_space<vmem>>, %arg5: memref<1x128xf32, #tpu.memory_space<vmem>>, %arg6: memref<8x128xf32, #tpu.memory_space<vmem>>, %arg7: memref<8x128xf32, #tpu.memory_space<vmem>>) attributes {dimension_semantics = [#tpu.dimension_semantics<parallel>, #tpu.dimension_semantics<parallel>, #tpu.dimension_semantics<arbitrary>], iteration_bounds = array<i64: 1, 1, 1>, scalar_prefetch = 0 : i64, scratch_operands = 1 : i64, tpu.core_type = #tpu.core_type<tc>, window_params = [{transform_indices = @transform_0, window_bounds = array<i64: 8, 128>}, {transform_indices = @transform_1, window_bounds = array<i64: 128, 128>}, {transform_indices = @transform_2, window_bounds = array<i64: 1, 128>}, {transform_indices = @transform_3, window_bounds = array<i64: 8, 128>}]} {
    %c0_i32 = arith.constant 0 : i32
    %0 = arith.cmpi eq, %arg2, %c0_i32 : i32
    %1 = arith.extui %0 : i1 to i32
    %c0_i32_0 = arith.constant 0 : i32
    %2 = arith.cmpi ne, %1, %c0_i32_0 : i32
    scf.if %2 {
      %c0_10 = arith.constant 0 : index
      %c0_11 = arith.constant 0 : index
      %12 = vector.load %arg5[%c0_10, %c0_11] : memref<1x128xf32, #tpu.memory_space<vmem>>, vector<1x128xf32>
      %13 = vector.shape_cast %12 : vector<1x128xf32> to vector<1x128xf32>
      %14 = vector.broadcast %13 : vector<1x128xf32> to vector<8x128xf32>
      %c0_12 = arith.constant 0 : index
      %c0_13 = arith.constant 0 : index
      %15 = vector.load %arg7[%c0_12, %c0_13] : memref<8x128xf32, #tpu.memory_space<vmem>>, vector<8x128xf32>
      tpu.vector_store %arg7[%c0_12, %c0_13], %14 {strides = array<i32>} : memref<8x128xf32, #tpu.memory_space<vmem>>, vector<8x128xf32>,
    } else {
    }
    %c0 = arith.constant 0 : index
    %c0_1 = arith.constant 0 : index
    %3 = vector.load %arg7[%c0, %c0_1] : memref<8x128xf32, #tpu.memory_space<vmem>>, vector<8x128xf32>
    %c0_2 = arith.constant 0 : index
    %c0_3 = arith.constant 0 : index
    %4 = vector.load %arg3[%c0_2, %c0_3] : memref<8x128xf32, #tpu.memory_space<vmem>>, vector<8x128xf32>
    %c0_4 = arith.constant 0 : index
    %c0_5 = arith.constant 0 : index
    %5 = vector.load %arg4[%c0_4, %c0_5] : memref<128x128xf32, #tpu.memory_space<vmem>>, vector<128x128xf32>
    %cst = arith.constant dense<0.000000e+00> : vector<8x128xf32>
    %6 = tpu.matmul %4, %5, %cst {dimension_numbers = #tpu.dot_dimension_numbers<[1], [1], [0], [0], [0, 0, 1, 0], [], []>} : vector<8x128xf32>, vector<128x128xf32>, vector<8x128xf32> -> vector<8x128xf32>
    %7 = arith.addf %3, %6 : vector<8x128xf32>
    %c0_6 = arith.constant 0 : index
    %c0_7 = arith.constant 0 : index
    %8 = vector.load %arg7[%c0_6, %c0_7] : memref<8x128xf32, #tpu.memory_space<vmem>>, vector<8x128xf32>
    tpu.vector_store %arg7[%c0_6, %c0_7], %7 {strides = array<i32>} : memref<8x128xf32, #tpu.memory_space<vmem>>, vector<8x128xf32>,
    %c0_i32_8 = arith.constant 0 : i32
    %9 = arith.cmpi eq, %arg2, %c0_i32_8 : i32
    %10 = arith.extui %9 : i1 to i32
    %c0_i32_9 = arith.constant 0 : i32
    %11 = arith.cmpi ne, %10, %c0_i32_9 : i32
    scf.if %11 {
      %c0_10 = arith.constant 0 : index
      %c0_11 = arith.constant 0 : index
      %12 = vector.load %arg7[%c0_10, %c0_11] : memref<8x128xf32, #tpu.memory_space<vmem>>, vector<8x128xf32>
      %cst_12 = arith.constant 0.000000e+00 : f32
      %13 = vector.broadcast %cst_12 : f32 to vector<8x128xf32>
      %14 = arith.maximumf %12, %13 : vector<8x128xf32>
      %c0_13 = arith.constant 0 : index
      %c0_14 = arith.constant 0 : index
      %15 = vector.load %arg6[%c0_13, %c0_14] : memref<8x128xf32, #tpu.memory_space<vmem>>, vector<8x128xf32>
      tpu.vector_store %arg6[%c0_13, %c0_14], %14 {strides = array<i32>} : memref<8x128xf32, #tpu.memory_space<vmem>>, vector<8x128xf32>,
    } else {
    }
    return
  }
  func.func @transform_0(%arg0: i32, %arg1: i32, %arg2: i32) -> (i32, i32) {
    %c0_i32 = arith.constant 0 : i32
    return %arg0, %arg2 : i32, i32
  }
  func.func @transform_1(%arg0: i32, %arg1: i32, %arg2: i32) -> (i32, i32) {
    %c0_i32 = arith.constant 0 : i32
    return %arg1, %arg2 : i32, i32
  }
  func.func @transform_2(%arg0: i32, %arg1: i32, %arg2: i32) -> (i32, i32) {
    %c0_i32 = arith.constant 0 : i32
    %c0_i32_0 = arith.constant 0 : i32
    return %c0_i32, %arg1 : i32, i32
  }
  func.func @transform_3(%arg0: i32, %arg1: i32, %arg2: i32) -> (i32, i32) {
    %c0_i32 = arith.constant 0 : i32
    return %arg0, %arg1 : i32, i32
  }
}

</mosaic_0001>

<llo_original>
// kernel: tpu_custom_call.1
$region0: #{tpu_custom_call.1}
  #allocation0 [shape = 'u32[]', space=smem, size = 0x4, offset = 0x4, fixed_abs, tag = 'smem constant byte address 0x4 - core index']
  #allocation1 [shape = 'u32[144,128]{1,0:T(1,128)}', space=vmem, size = 0x12000, scoped, tag = 'internal scratch']
  #allocation2 [shape = 'f32[8,128]{1,0:T(8,128)}', space=vmem, size = 0x1000, scoped, tag = 'scratch operand']
  %s0 = inlined_call_operand.hbm [shape: f32[8,128], index: 0, kind: input, shape index: {}]
  %s1 = inlined_call_operand.hbm [shape: f32[128,128], index: 1, kind: input, shape index: {}]
  %s2 = inlined_call_operand.vmem [shape: f32[1,128], index: 2, kind: input, shape index: {}]
  %s3 = inlined_call_operand.hbm [shape: f32[8,128], index: 3, kind: output, shape index: {}]
  %s4 = sld [smem:[#allocation0]]
  $region38: #{tpu_custom_call.1} parent=0
    _
  %s6 = ssub.s32 1, %s4
  %s7 = scalar_select 0, %s6, %s4
  $region1: #{tpu_custom_call.1} parent=0
    #allocation3 [shape = 'u8[4096]{0}', space=vmem, size = 0x1000, scoped, tag = 'input window, operand 0, single buffered']
    #allocation4 [shape = 's32[1]{0}', space=sflag, size = 0x4, scoped, tag = 'scoped memory for tpu_custom_call.1']
    #allocation5 [shape = 's32[1]{0}', space=sflag, size = 0x4, scoped, tag = 'scoped memory for tpu_custom_call.1']
    #allocation6 [shape = 'u8[65536]{0}', space=vmem, size = 0x10000, scoped, tag = 'input window, operand 1, single buffered']
    #allocation7 [shape = 's32[1]{0}', space=sflag, size = 0x4, scoped, tag = 'scoped memory for tpu_custom_call.1']
    #allocation8 [shape = 'u8[4096]{0}', space=vmem, size = 0x1000, scoped, tag = 'output window, operand 0, single buffered']
    %8 = vsyncpa [#allocation4], 0
    %9 = vsyncpa [#allocation7], 0
    %10 = vsyncpa [#allocation5], 0
    // Predicated region
    $region2: #{tpu_custom_call.1} parent=1 // pred_check
      _
    $region3: #{tpu_custom_call.1} parent=1 // pred_check_branch
      %12 = sbr.rel (0) target = $region5
    $region4: #{tpu_custom_call.1} parent=1 // pred_region
      %s14 = ssub.s32 128, 128
      %15 = vsyncadd [#allocation4], %s14
      %s17 = sshll.u32 [#allocation3], 4
      %s18 = int_to_ptr.vmem [resolvable:$true] %s17
      %20 = dma.hbm_to_vmem [thread:$0]  %s0, 128, %s18, [#allocation4]
    $region5: #{tpu_custom_call.1} parent=1 // pred_fallthru
      _
    // Predicated region
    $region6: #{tpu_custom_call.1} parent=1 // pred_check
      _
    $region7: #{tpu_custom_call.1} parent=1 // pred_check_branch
      %22 = sbr.rel (0) target = $region9
    $region8: #{tpu_custom_call.1} parent=1 // pred_region
      %s24 = ssub.s32 2048, 2048
      %25 = vsyncadd [#allocation7], %s24
      %s26 = sshll.u32 [#allocation6], 4
      %s27 = int_to_ptr.vmem [resolvable:$true] %s26
      %32 = dma.hbm_to_vmem [thread:$0]  %s1, 2048, %s27, [#allocation7], 128, 128, 8
    $region9: #{tpu_custom_call.1} parent=1 // pred_fallthru
      _
    // Predicated region
    $region10: #{tpu_custom_call.1} parent=1 // pred_check
      _
    $region11: #{tpu_custom_call.1} parent=1 // pred_check_branch
      %34 = sbr.rel (0) target = $region13
    $region12: #{tpu_custom_call.1} parent=1 // pred_region
      _
    $region13: #{tpu_custom_call.1} parent=1 // pred_fallthru
      _
    // Predicated region
    $region14: #{tpu_custom_call.1} parent=1 // pred_check
      _
    $region15: #{tpu_custom_call.1} parent=1 // pred_check_branch
      %36 = sbr.rel (0) target = $region17
    $region16: #{tpu_custom_call.1} parent=1 // pred_region
      %37 = dma.done [#allocation4], 128
    $region17: #{tpu_custom_call.1} parent=1 // pred_fallthru
      _
    // Predicated region
    $region18: #{tpu_custom_call.1} parent=1 // pred_check
      _
    $region19: #{tpu_custom_call.1} parent=1 // pred_check_branch
      %39 = sbr.rel (0) target = $region21
    $region20: #{tpu_custom_call.1} parent=1 // pred_region
      %40 = dma.done [#allocation7], 2048
    $region21: #{tpu_custom_call.1} parent=1 // pred_fallthru
      _
    %p41 = scmp.eq.s32.totalorder 0, 0
    // Predicated region
    $region22: #{tpu_custom_call.1} parent=1 // pred_check
      %p42 = pneg %p41
    $region23: #{tpu_custom_call.1} parent=1 // pred_check_branch
      %44 = sbr.rel (%p42) target = $region25
    $region24: #{tpu_custom_call.1} parent=1 // pred_region
      %v45 = vld [vmem:[%s2] sm:$0x1]
      %v47 = vlaneseq
      %v48 = vshrl.u32 %v47, 7
      %v49 = vsub.s32 0, %v48
      %v50 = vrot.slane %v45, %v49
      %52 = vst [vmem:[#allocation2] sm:$0xff] %v50
    $region25: #{tpu_custom_call.1} parent=1 // pred_fallthru
      _
    %v53 = vld [vmem:[#allocation2] sm:$0xff]
    %v54 = vld [vmem:[#allocation3] sm:$0xff]
    %v55 = vld [vmem:[#allocation6] sm:$0xff]
    %v56 = vld [vmem:[#allocation6 + $0x8] sm:$0xff]
    %v57 = vld [vmem:[#allocation6 + $0x10] sm:$0xff]
    %v58 = vld [vmem:[#allocation6 + $0x18] sm:$0xff]
    %v59 = vld [vmem:[#allocation6 + $0x20] sm:$0xff]
    %v60 = vld [vmem:[#allocation6 + $0x28] sm:$0xff]
    %v61 = vld [vmem:[#allocation6 + $0x30] sm:$0xff]
    %v62 = vld [vmem:[#allocation6 + $0x38] sm:$0xff]
    %v63 = vld [vmem:[#allocation6 + $0x40] sm:$0xff]
    %v64 = vld [vmem:[#allocation6 + $0x48] sm:$0xff]
    %v65 = vld [vmem:[#allocation6 + $0x50] sm:$0xff]
    %v66 = vld [vmem:[#allocation6 + $0x58] sm:$0xff]
    %v67 = vld [vmem:[#allocation6 + $0x60] sm:$0xff]
    %v68 = vld [vmem:[#allocation6 + $0x68] sm:$0xff]
    %v69 = vld [vmem:[#allocation6 + $0x70] sm:$0xff]
    %v70 = vld [vmem:[#allocation6 + $0x78] sm:$0xff]
    %71 = vmatprep.subr.mxu0 0.0
    %72 = vmatpush1.xpose.msra.mxu0 %v70
    %73 = vmatprep.subr.mxu0 0.0
    %74 = vmatpush1.xpose.msra.mxu0 %v69
    %75 = vmatprep.subr.mxu0 0.0
    %76 = vmatpush1.xpose.msra.mxu0 %v68
    %77 = vmatprep.subr.mxu0 0.0
    %78 = vmatpush1.xpose.msra.mxu0 %v67
    %79 = vmatprep.subr.mxu0 0.0
    %80 = vmatpush1.xpose.msra.mxu0 %v66
    %81 = vmatprep.subr.mxu0 0.0
    %82 = vmatpush1.xpose.msra.mxu0 %v65
    %83 = vmatprep.subr.mxu0 0.0
    %84 = vmatpush1.xpose.msra.mxu0 %v64
    %85 = vmatprep.subr.mxu0 0.0
    %86 = vmatpush1.xpose.msra.mxu0 %v63
    %87 = vmatprep.subr.mxu0 0.0
    %88 = vmatpush1.xpose.msra.mxu0 %v62
    %89 = vmatprep.subr.mxu0 0.0
    %90 = vmatpush1.xpose.msra.mxu0 %v61
    %91 = vmatprep.subr.mxu0 0.0
    %92 = vmatpush1.xpose.msra.mxu0 %v60
    %93 = vmatprep.subr.mxu0 0.0
    %94 = vmatpush1.xpose.msra.mxu0 %v59
    %95 = vmatprep.subr.mxu0 0.0
    %96 = vmatpush1.xpose.msra.mxu0 %v58
    %97 = vmatprep.subr.mxu0 0.0
    %98 = vmatpush1.xpose.msra.mxu0 %v57
    %99 = vmatprep.subr.mxu0 0.0
    %100 = vmatpush1.xpose.msra.mxu0 %v56
    %101 = vmatprep.subr.mxu0 0.0
    %102 = vmatpush1.xpose.msra.mxu0 %v55
    %103 = vmatprep.subr.mxu0 0.0
    %104 = vmatpush2.xpose.msra.mxu0 0.0
    %105 = vmatprep.subr.mxu0 0.0
    %106 = vmatpush2.xpose.msra.mxu0 0.0
    %107 = vmatprep.subr.mxu0 0.0
    %108 = vmatpush2.xpose.msra.mxu0 0.0
    %109 = vmatprep.subr.mxu0 0.0
    %110 = vmatpush2.xpose.msra.mxu0 0.0
    %111 = vmatprep.subr.mxu0 0.0
    %112 = vmatpush2.xpose.msra.mxu0 0.0
    %113 = vmatprep.subr.mxu0 0.0
    %114 = vmatpush2.xpose.msra.mxu0 0.0
    %115 = vmatprep.subr.mxu0 0.0
    %116 = vmatpush2.xpose.msra.mxu0 0.0
    %117 = vmatprep.subr.mxu0 0.0
    %118 = vmatpush2.xpose.msra.mxu0 0.0
    %119 = vmatprep.subr.mxu0 0.0
    %120 = vmatpush2.xpose.msra.mxu0 0.0
    %121 = vmatprep.subr.mxu0 0.0
    %122 = vmatpush2.xpose.msra.mxu0 0.0
    %123 = vmatprep.subr.mxu0 0.0
    %124 = vmatpush2.xpose.msra.mxu0 0.0
    %125 = vmatprep.subr.mxu0 0.0
    %126 = vmatpush2.xpose.msra.mxu0 0.0
    %127 = vmatprep.subr.mxu0 0.0
    %128 = vmatpush2.xpose.msra.mxu0 0.0
    %129 = vmatprep.subr.mxu0 0.0
    %130 = vmatpush2.xpose.msra.mxu0 0.0
    %131 = vmatprep.subr.mxu0 0.0
    %132 = vmatpush2.xpose.msra.mxu0 0.0
    %133 = vmatprep.subr.mxu0 0.0
    %134 = vmatpush2.xpose.msra.mxu0 0.0
    %135 = vmatprep.mubr.f32.mxu0 0.0
    %136 = vmatmul.mubr.f32.gmra.mxu0 %v54
    %v137 = vpop.f32.mrf.mxu0
    %v138 = vadd.f32 0.0, %v137
    %v139 = vpop.f32.mrf.mxu0
    %140 = vdwg.mxu0
    %v141 = vadd.f32 %v53, %v138
    %142 = vst [vmem:[#allocation2] sm:$0xff] %v141
    // Predicated region
    $region26: #{tpu_custom_call.1} parent=1 // pred_check
      %p143 = pneg %p41
    $region27: #{tpu_custom_call.1} parent=1 // pred_check_branch
      %145 = sbr.rel (%p143) target = $region29
    $region28: #{tpu_custom_call.1} parent=1 // pred_region
      %v146 = vld [vmem:[#allocation2] sm:$0xff]
      %v147 = vmax.f32 %v146, 0.0
      %148 = vst [vmem:[#allocation8] sm:$0xff] %v147
    $region29: #{tpu_custom_call.1} parent=1 // pred_fallthru
      _
    // Predicated region
    $region30: #{tpu_custom_call.1} parent=1 // pred_check
      _
    $region31: #{tpu_custom_call.1} parent=1 // pred_check_branch
      %150 = sbr.rel (0) target = $region33
    $region32: #{tpu_custom_call.1} parent=1 // pred_region
      %s152 = ssub.s32 128, 128
      %153 = vsyncadd [#allocation5], %s152
      %s155 = sshll.u32 [#allocation8], 4
      %s156 = int_to_ptr.vmem [resolvable:$true] %s155
      %158 = dma.vmem_to_hbm [thread:$0]  %s156, 128, %s3, [#allocation5]
    $region33: #{tpu_custom_call.1} parent=1 // pred_fallthru
      _
    // Predicated region
    $region34: #{tpu_custom_call.1} parent=1 // pred_check
      _
    $region35: #{tpu_custom_call.1} parent=1 // pred_check_branch
      %160 = sbr.rel (0) target = $region37
    $region36: #{tpu_custom_call.1} parent=1 // pred_region
      %161 = dma.done [#allocation5], 128
    $region37: #{tpu_custom_call.1} parent=1 // pred_fallthru
      _
    %162 = vsyncpa [#allocation4], 1
    %163 = vsyncpa [#allocation7], 1
    %164 = vsyncpa [#allocation5], 1

</llo_original>
